<compile_context>
chip_gen: v5e
topology: v5e:2x2
jax: 0.10.0
libtpu: 0.0.40
codegen_flags: <defaults>
</compile_context>

<pallas_src>
import functools
import math

import jax
import jax.numpy as jnp
from jax.experimental import pallas as pl
from jax.experimental.pallas import tpu as pltpu


# ---------------------------------------------------------------------------
# Shared 5-layer tanh MLP body.  Master weights are f32; MXU operands are
# cast to bf16 at the matmul boundary with f32 accumulation.  Returns ALL
# activations so the fused learner kernel can reuse them for the backward.
# ---------------------------------------------------------------------------
def _mlp_acts(x, w_refs, b_refs):
    acts = [x]
    h = x
    for w_ref, b_ref in zip(w_refs, b_refs):
        z = jnp.dot(h.astype(jnp.bfloat16), w_ref[...].astype(jnp.bfloat16),
                    preferred_element_type=jnp.float32) + b_ref[...]
        h = jnp.tanh(z)          # f32 tanh (EUP-safe on v5e as well)
        acts.append(h)
    return acts


# ---------------------------------------------------------------------------
# Plain forward kernel (action selection / generic forward()).
# ---------------------------------------------------------------------------
def _forward_kernel(x_ref, *refs):
    o_ref = refs[-1]
    w_refs = refs[0:-1:2]
    b_refs = refs[1:-1:2]
    o_ref[...] = _mlp_acts(x_ref[...], w_refs, b_refs)[-1].astype(o_ref.dtype)


def _default_parallel_tiles():
    # One grid step per TensorCore: gridless on single-core chips (v5e/v6e),
    # a 2-way "parallel" grid on dual-core chips (v7x).
    try:
        kind = jax.devices()[0].device_kind.lower()
    except Exception:
        return 1
    return 2 if "v7" in kind else 1


def _param_bytes(params):
    return sum(int(w.size) * w.dtype.itemsize + int(b.size) * b.dtype.itemsize
               for w, b in params)


def dqn_forward(x, params, *, num_parallel_tiles=None):
    """Forward pass of the 5-layer tanh MLP.

    x:      (batch, n_state) float32
    params: list of 5 (W, b); W is (in, out) float32, b is (1, out) float32.
    """
    batch, n_state = x.shape
    n_action = params[-1][0].shape[1]
    dims = [n_state] + [w.shape[1] for w, _ in params]

    flat = [x]
    for w, b in params:
        flat += [w, b]
    out_shape = jax.ShapeDtypeStruct((batch, n_action), jnp.float32)

    cost = pl.CostEstimate(
        flops=int(sum(2 * batch * a * b for a, b in zip(dims[:-1], dims[1:]))),
        transcendentals=int(batch * sum(dims[1:])),
        bytes_accessed=int(x.size * x.dtype.itemsize + _param_bytes(params)
                           + batch * n_action * 4),
    )

    tiles = (_default_parallel_tiles() if num_parallel_tiles is None
             else int(num_parallel_tiles))

    # Multi-TensorCore chips: exactly one grid step per core, weights resident.
    if tiles > 1 and batch % tiles == 0 and (batch // tiles) % 8 == 0:
        bt = batch // tiles
        in_specs = [pl.BlockSpec((bt, n_state), lambda i: (i, 0))]
        for w, b in params:
            in_specs.append(pl.BlockSpec(w.shape, lambda i: (0, 0)))
            in_specs.append(pl.BlockSpec(b.shape, lambda i: (0, 0)))
        return pl.pallas_call(
            _forward_kernel,
            out_shape=out_shape,
            grid=(tiles,),
            in_specs=in_specs,
            out_specs=pl.BlockSpec((bt, n_action), lambda i: (i, 0)),
            compiler_params=pltpu.CompilerParams(
                dimension_semantics=("parallel",)),
            cost_estimate=cost,
        )(*flat)

    # Single-core chips (or tiny batches): one gridless, fully VMEM-resident call.
    return pl.pallas_call(
        _forward_kernel,
        out_shape=out_shape,
        in_specs=[pl.BlockSpec(memory_space=pltpu.MemorySpace.VMEM)] * len(flat),
        out_specs=pl.BlockSpec(memory_space=pltpu.MemorySpace.VMEM),
        cost_estimate=cost,
    )(*flat)


# ---------------------------------------------------------------------------
# Fused learner-step kernel:
#   forward(state) + forward(next_state) + Q(s,a) + TD target + SmoothL1 loss
#   + manual backward + gradient clamp(+/-1) + SGD update, all in one call.
# ---------------------------------------------------------------------------
def _learner_kernel(*refs, gamma, lr, n_layers):
    s_ref, ns_ref, a_ref, r_ref = refs[:4]
    p_refs = refs[4:4 + 2 * n_layers]
    w_refs = p_refs[0::2]
    b_refs = p_refs[1::2]
    o_refs = refs[4 + 2 * n_layers:]
    nw_refs = o_refs[0:2 * n_layers:2]
    nb_refs = o_refs[1:2 * n_layers:2]
    sa_ref, tgt_ref, loss_ref = o_refs[2 * n_layers:]

    batch = s_ref.shape[0]
    n_action = w_refs[-1].shape[1]

    # ---- forward on state (keep activations in VMEM for the backward) ----
    acts = _mlp_acts(s_ref[...], w_refs, b_refs)
    q_s = acts[-1]

    # ---- forward on next_state (target path, treated as constant) --------
    q_ns = _mlp_acts(ns_ref[...], w_refs, b_refs)[-1]

    # Q(s, a): one-hot gather on the lane (action) axis.
    lane = jax.lax.broadcasted_iota(jnp.int32, (batch, n_action), 1)
    onehot = (lane == a_ref[...]).astype(jnp.float32)
    sa = jnp.sum(q_s * onehot, axis=-1, keepdims=True)              # (B, 1)

    # TD target: gamma * max_a' Q(s', a') + r  (no gradient through it).
    tgt = gamma * jnp.max(q_ns, axis=-1, keepdims=True) + r_ref[...]
    sa_ref[...] = sa
    tgt_ref[...] = tgt

    # SmoothL1 (beta = 1) mean loss over the batch.
    d = sa - tgt
    ad = jnp.abs(d)
    loss_ref[...] = jnp.sum(jnp.where(ad < 1.0, 0.5 * d * d, ad - 0.5),
                            keepdims=True) * (1.0 / batch)

    # ---- backward: SmoothL1 -> one-hot -> 5x (tanh, linear) ---------------
    g = jnp.clip(d, -1.0, 1.0) * (1.0 / batch)      # dL/d Q(s,a), (B, 1)
    delta = g * onehot                               # dL/d Q(s),   (B, A)
    for l in range(n_layers - 1, -1, -1):
        h_l, h_prev = acts[l + 1], acts[l]
        dz = delta * (1.0 - h_l * h_l)               # tanh'
        dw = jnp.dot(h_prev.T, dz, preferred_element_type=jnp.float32)
        db = jnp.sum(dz, axis=0, keepdims=True)
        if l > 0:
            delta = jnp.dot(dz, w_refs[l][...].T,
                            preferred_element_type=jnp.float32)
        # PyTorch: param.grad.clamp_(-1, 1); optimizer.step() (SGD) — fused.
        nw_refs[l][...] = w_refs[l][...] - lr * jnp.clip(dw, -1.0, 1.0)
        nb_refs[l][...] = b_refs[l][...] - lr * jnp.clip(db, -1.0, 1.0)

    # TODO(synk): stateful optimizers (Adam/RMSprop moments) and the host-side
    # replay memory / epsilon-greedy logic of learn() are not expressed here.


def dqn_learner_step(state, next_state, action, reward, gamma, lr, params):
    """One fused DQN learner step.

    Returns (new_params, Q(s,a), TD target, SmoothL1 loss)."""
    batch, n_state = state.shape
    assert batch % 8 == 0, "replay batch must be a sublane (8) multiple"
    n_action = params[-1][0].shape[1]
    dims = [n_state] + [w.shape[1] for w, _ in params]

    flat = [state, next_state, action, reward]
    for w, b in params:
        flat += [w, b]

    out_shape = []
    for w, b in params:
        out_shape.append(jax.ShapeDtypeStruct(w.shape, w.dtype))
        out_shape.append(jax.ShapeDtypeStruct(b.shape, b.dtype))
    out_shape += [
        jax.ShapeDtypeStruct((batch, 1), jnp.float32),   # Q(s, a)
        jax.ShapeDtypeStruct((batch, 1), jnp.float32),   # TD target
        jax.ShapeDtypeStruct((1, 1), jnp.float32),       # SmoothL1 loss
    ]
    out_shape = tuple(out_shape)

    fwd_flops = sum(2 * batch * a * b for a, b in zip(dims[:-1], dims[1:]))
    out_bytes = sum(math.prod(o.shape) * o.dtype.itemsize for o in out_shape)
    cost = pl.CostEstimate(
        flops=int(4 * fwd_flops),                       # 2 fwd + ~2x fwd for bwd
        transcendentals=int(2 * batch * sum(dims[1:])),
        bytes_accessed=int(sum(int(a.size) * a.dtype.itemsize for a in flat)
                           + out_bytes),
    )

    kernel = functools.partial(_learner_kernel, gamma=float(gamma),
                               lr=float(lr), n_layers=len(params))
    outs = pl.pallas_call(
        kernel,
        out_shape=out_shape,
        in_specs=[pl.BlockSpec(memory_space=pltpu.MemorySpace.VMEM)] * len(flat),
        out_specs=tuple(pl.BlockSpec(memory_space=pltpu.MemorySpace.VMEM)
                        for _ in out_shape),
        cost_estimate=cost,
    )(*flat)

    new_params = [(outs[2 * i], outs[2 * i + 1]) for i in range(len(params))]
    return new_params, outs[-3], outs[-2], outs[-1]


# ---------------------------------------------------------------------------
# Parameter init + pure-JAX references.
# ---------------------------------------------------------------------------
def init_params(key, n_state, n_action):
    """nn.Linear-style init; f32 master weights (stored (in, out))."""
    n_hidden = 5 * n_state
    layer_dims = [(n_state, n_hidden), (n_hidden, n_hidden), (n_hidden, n_hidden),
                  (n_hidden, n_hidden), (n_hidden, n_action)]
    params = []
    for fan_in, fan_out in layer_dims:
        key, kw, kb = jax.random.split(key, 3)
        bound = 1.0 / math.sqrt(fan_in)
        w = jax.random.uniform(kw, (fan_in, fan_out), jnp.float32,
                               minval=-bound, maxval=bound)
        b = jax.random.uniform(kb, (1, fan_out), jnp.float32,
                               minval=-bound, maxval=bound)
        params.append((w, b))
    return params


def reference_forward(x, params):
    h = x
    for w, b in params:
        z = jnp.dot(h.astype(jnp.bfloat16), w.astype(jnp.bfloat16),
                    preferred_element_type=jnp.float32) + b
        h = jnp.tanh(z)
    return h


def reference_learner_step(state, next_state, action, reward, gamma, lr, params):
    def loss_fn(ps):
        q_s = reference_forward(state, ps)
        sa = jnp.take_along_axis(q_s, action, axis=1)
        q_ns = reference_forward(next_state, ps)
        tgt = jax.lax.stop_gradient(
            gamma * jnp.max(q_ns, axis=1, keepdims=True) + reward)
        d = sa - tgt
        ad = jnp.abs(d)
        loss = jnp.mean(jnp.where(ad < 1.0, 0.5 * d * d, ad - 0.5))
        return loss, (sa, tgt)

    (loss, (sa, tgt)), grads = jax.value_and_grad(loss_fn, has_aux=True)(params)
    new_params = [
        (w - lr * jnp.clip(gw, -1.0, 1.0), b - lr * jnp.clip(gb, -1.0, 1.0))
        for (w, b), (gw, gb) in zip(params, grads)
    ]
    return new_params, sa, tgt, loss


# ---------------------------------------------------------------------------
if __name__ == "__main__":
    n_state = 16          # -> n_hidden = 80
    n_action = 4
    gamma = 0.9
    lr = 0.5              # large LR so the single fused update is visible in tests

    key = jax.random.PRNGKey(0)
    key, kp = jax.random.split(key)
    params = init_params(kp, n_state, n_action)

    # 1) Action-selection-sized forward (gridless, fully VMEM-resident).
    key, kx = jax.random.split(key)
    x_small = jax.random.normal(kx, (8, n_state), jnp.float32)
    q_small = jax.block_until_ready(dqn_forward(x_small, params))
    assert q_small.shape == (8, n_action)
    assert jnp.allclose(q_small, reference_forward(x_small, params),
                        atol=2e-3, rtol=2e-3), "small-batch forward mismatch"

    # 2) Larger-batch forward (one step per TensorCore on v7x, gridless elsewhere).
    key, kx = jax.random.split(key)
    x_big = jax.random.normal(kx, (512, n_state), jnp.float32)
    q_big = jax.block_until_ready(dqn_forward(x_big, params))
    assert q_big.shape == (512, n_action)
    assert jnp.allclose(q_big, reference_forward(x_big, params),
                        atol=2e-3, rtol=2e-3), "large-batch forward mismatch"

    # 3) Fused learner step (fwd + bwd + clamp + SGD) at replay batch 128.
    B = 128
    key, k1, k2, k3, k4 = jax.random.split(key, 5)
    state = jax.random.normal(k1, (B, n_state), jnp.float32)
    next_state = jax.random.normal(k2, (B, n_state), jnp.float32)
    action = jax.random.randint(k3, (B, 1), 0, n_action, dtype=jnp.int32)
    reward = jax.random.normal(k4, (B, 1), jnp.float32)

    new_params, sa, tgt, loss = dqn_learner_step(
        state, next_state, action, reward, gamma, lr, params)
    jax.block_until_ready(loss)

    ref_params, sa_ref, tgt_ref, loss_ref = reference_learner_step(
        state, next_state, action, reward, gamma, lr, params)

    assert jnp.allclose(sa, sa_ref, atol=2e-3, rtol=2e-3), "Q(s,a) mismatch"
    assert jnp.allclose(tgt, tgt_ref, atol=2e-3, rtol=2e-3), "TD target mismatch"
    assert jnp.allclose(loss[0, 0], loss_ref, atol=2e-3, rtol=2e-3), "loss mismatch"
    for li, ((w_k, b_k), (w_r, b_r)) in enumerate(zip(new_params, ref_params)):
        assert jnp.allclose(w_k, w_r, atol=2e-3, rtol=2e-3), f"W{li+1} update mismatch"
        assert jnp.allclose(b_k, b_r, atol=2e-3, rtol=2e-3), f"b{li+1} update mismatch"

    print("KERNEL_OK")
</pallas_src>

<mosaic_0001>
module attributes {stable_mosaic.version = 11 : i64} {
  func.func @_forward_kernel(%arg0: memref<8x16xf32, #tpu.memory_space<vmem>>, %arg1: memref<16x80xf32, #tpu.memory_space<vmem>>, %arg2: memref<1x80xf32, #tpu.memory_space<vmem>>, %arg3: memref<80x80xf32, #tpu.memory_space<vmem>>, %arg4: memref<1x80xf32, #tpu.memory_space<vmem>>, %arg5: memref<80x80xf32, #tpu.memory_space<vmem>>, %arg6: memref<1x80xf32, #tpu.memory_space<vmem>>, %arg7: memref<80x80xf32, #tpu.memory_space<vmem>>, %arg8: memref<1x80xf32, #tpu.memory_space<vmem>>, %arg9: memref<80x4xf32, #tpu.memory_space<vmem>>, %arg10: memref<1x4xf32, #tpu.memory_space<vmem>>, %arg11: memref<8x4xf32, #tpu.memory_space<vmem>>) attributes {dimension_semantics = [], scalar_prefetch = 0 : i64, scratch_operands = 0 : i64, tpu.core_type = #tpu.core_type<tc>} {
    %c0 = arith.constant 0 : index
    %c0_0 = arith.constant 0 : index
    %0 = vector.load %arg0[%c0, %c0_0] : memref<8x16xf32, #tpu.memory_space<vmem>>, vector<8x16xf32>
    %1 = arith.truncf %0 : vector<8x16xf32> to vector<8x16xbf16>
    %c0_1 = arith.constant 0 : index
    %c0_2 = arith.constant 0 : index
    %2 = vector.load %arg1[%c0_1, %c0_2] : memref<16x80xf32, #tpu.memory_space<vmem>>, vector<16x80xf32>
    %3 = arith.truncf %2 : vector<16x80xf32> to vector<16x80xbf16>
    %cst = arith.constant dense<0.000000e+00> : vector<8x80xf32>
    %4 = tpu.matmul %1, %3, %cst {dimension_numbers = #tpu.dot_dimension_numbers<[1], [0], [0], [1], [0, 0, 1, 1], [], []>} : vector<8x16xbf16>, vector<16x80xbf16>, vector<8x80xf32> -> vector<8x80xf32>
    %c0_3 = arith.constant 0 : index
    %c0_4 = arith.constant 0 : index
    %5 = vector.load %arg2[%c0_3, %c0_4] : memref<1x80xf32, #tpu.memory_space<vmem>>, vector<1x80xf32>
    %6 = vector.broadcast %5 : vector<1x80xf32> to vector<8x80xf32>
    %7 = arith.addf %4, %6 : vector<8x80xf32>
    %8 = math.tanh %7 : vector<8x80xf32>
    %9 = arith.truncf %8 : vector<8x80xf32> to vector<8x80xbf16>
    %c0_5 = arith.constant 0 : index
    %c0_6 = arith.constant 0 : index
    %10 = vector.load %arg3[%c0_5, %c0_6] : memref<80x80xf32, #tpu.memory_space<vmem>>, vector<80x80xf32>
    %11 = arith.truncf %10 : vector<80x80xf32> to vector<80x80xbf16>
    %cst_7 = arith.constant dense<0.000000e+00> : vector<8x80xf32>
    %12 = tpu.matmul %9, %11, %cst_7 {dimension_numbers = #tpu.dot_dimension_numbers<[1], [0], [0], [1], [0, 0, 1, 1], [], []>} : vector<8x80xbf16>, vector<80x80xbf16>, vector<8x80xf32> -> vector<8x80xf32>
    %c0_8 = arith.constant 0 : index
    %c0_9 = arith.constant 0 : index
    %13 = vector.load %arg4[%c0_8, %c0_9] : memref<1x80xf32, #tpu.memory_space<vmem>>, vector<1x80xf32>
    %14 = vector.broadcast %13 : vector<1x80xf32> to vector<8x80xf32>
    %15 = arith.addf %12, %14 : vector<8x80xf32>
    %16 = math.tanh %15 : vector<8x80xf32>
    %17 = arith.truncf %16 : vector<8x80xf32> to vector<8x80xbf16>
    %c0_10 = arith.constant 0 : index
    %c0_11 = arith.constant 0 : index
    %18 = vector.load %arg5[%c0_10, %c0_11] : memref<80x80xf32, #tpu.memory_space<vmem>>, vector<80x80xf32>
    %19 = arith.truncf %18 : vector<80x80xf32> to vector<80x80xbf16>
    %cst_12 = arith.constant dense<0.000000e+00> : vector<8x80xf32>
    %20 = tpu.matmul %17, %19, %cst_12 {dimension_numbers = #tpu.dot_dimension_numbers<[1], [0], [0], [1], [0, 0, 1, 1], [], []>} : vector<8x80xbf16>, vector<80x80xbf16>, vector<8x80xf32> -> vector<8x80xf32>
    %c0_13 = arith.constant 0 : index
    %c0_14 = arith.constant 0 : index
    %21 = vector.load %arg6[%c0_13, %c0_14] : memref<1x80xf32, #tpu.memory_space<vmem>>, vector<1x80xf32>
    %22 = vector.broadcast %21 : vector<1x80xf32> to vector<8x80xf32>
    %23 = arith.addf %20, %22 : vector<8x80xf32>
    %24 = math.tanh %23 : vector<8x80xf32>
    %25 = arith.truncf %24 : vector<8x80xf32> to vector<8x80xbf16>
    %c0_15 = arith.constant 0 : index
    %c0_16 = arith.constant 0 : index
    %26 = vector.load %arg7[%c0_15, %c0_16] : memref<80x80xf32, #tpu.memory_space<vmem>>, vector<80x80xf32>
    %27 = arith.truncf %26 : vector<80x80xf32> to vector<80x80xbf16>
    %cst_17 = arith.constant dense<0.000000e+00> : vector<8x80xf32>
    %28 = tpu.matmul %25, %27, %cst_17 {dimension_numbers = #tpu.dot_dimension_numbers<[1], [0], [0], [1], [0, 0, 1, 1], [], []>} : vector<8x80xbf16>, vector<80x80xbf16>, vector<8x80xf32> -> vector<8x80xf32>
    %c0_18 = arith.constant 0 : index
    %c0_19 = arith.constant 0 : index
    %29 = vector.load %arg8[%c0_18, %c0_19] : memref<1x80xf32, #tpu.memory_space<vmem>>, vector<1x80xf32>
    %30 = vector.broadcast %29 : vector<1x80xf32> to vector<8x80xf32>
    %31 = arith.addf %28, %30 : vector<8x80xf32>
    %32 = math.tanh %31 : vector<8x80xf32>
    %33 = arith.truncf %32 : vector<8x80xf32> to vector<8x80xbf16>
    %c0_20 = arith.constant 0 : index
    %c0_21 = arith.constant 0 : index
    %34 = vector.load %arg9[%c0_20, %c0_21] : memref<80x4xf32, #tpu.memory_space<vmem>>, vector<80x4xf32>
    %35 = arith.truncf %34 : vector<80x4xf32> to vector<80x4xbf16>
    %cst_22 = arith.constant dense<0.000000e+00> : vector<8x4xf32>
    %36 = tpu.matmul %33, %35, %cst_22 {dimension_numbers = #tpu.dot_dimension_numbers<[1], [0], [0], [1], [0, 0, 1, 1], [], []>} : vector<8x80xbf16>, vector<80x4xbf16>, vector<8x4xf32> -> vector<8x4xf32>
    %c0_23 = arith.constant 0 : index
    %c0_24 = arith.constant 0 : index
    %37 = vector.load %arg10[%c0_23, %c0_24] : memref<1x4xf32, #tpu.memory_space<vmem>>, vector<1x4xf32>
    %38 = vector.broadcast %37 : vector<1x4xf32> to vector<8x4xf32>
    %39 = arith.addf %36, %38 : vector<8x4xf32>
    %40 = math.tanh %39 : vector<8x4xf32>
    %c0_25 = arith.constant 0 : index
    %c0_26 = arith.constant 0 : index
    %41 = vector.load %arg11[%c0_25, %c0_26] : memref<8x4xf32, #tpu.memory_space<vmem>>, vector<8x4xf32>
    tpu.vector_store %arg11[%c0_25, %c0_26], %40 {strides = array<i32>} : memref<8x4xf32, #tpu.memory_space<vmem>>, vector<8x4xf32>,
    return
  }
}

</mosaic_0001>

<llo_original>
// kernel: tpu_custom_call.1
$region0: #{tpu_custom_call.1}
  #allocation0 [shape = 'u32[]', space=smem, size = 0x4, offset = 0x4, fixed_abs, tag = 'smem constant byte address 0x4 - core index']
  #allocation1 [shape = 'u32[72,128]{1,0:T(1,128)}', space=vmem, size = 0x9000, scoped, tag = 'internal scratch']
  %s0 = inlined_call_operand.hbm [shape: f32[8,16], index: 0, kind: input, shape index: {}]
  %s1 = inlined_call_operand.hbm [shape: f32[16,80], index: 1, kind: input, shape index: {}]
  %s2 = inlined_call_operand.vmem [shape: f32[1,80], index: 2, kind: input, shape index: {}]
  %s3 = inlined_call_operand.vmem [shape: f32[80,80], index: 3, kind: input, shape index: {}]
  %s4 = inlined_call_operand.vmem [shape: f32[1,80], index: 4, kind: input, shape index: {}]
  %s5 = inlined_call_operand.hbm [shape: f32[80,80], index: 5, kind: input, shape index: {}]
  %s6 = inlined_call_operand.vmem [shape: f32[1,80], index: 6, kind: input, shape index: {}]
  %s7 = inlined_call_operand.hbm [shape: f32[80,80], index: 7, kind: input, shape index: {}]
  %s8 = inlined_call_operand.vmem [shape: f32[1,80], index: 8, kind: input, shape index: {}]
  %s9 = inlined_call_operand.vmem [shape: f32[80,4], index: 9, kind: input, shape index: {}]
  %s10 = inlined_call_operand.vmem [shape: f32[1,4], index: 10, kind: input, shape index: {}]
  %s11 = inlined_call_operand.vmem [shape: f32[8,4], index: 11, kind: output, shape index: {}]
  %s12 = sld [smem:[#allocation0]]
  $region70: #{tpu_custom_call.1} parent=0
    _
  %s14 = ssub.s32 1, %s12
  %s15 = scalar_select 0, %s14, %s12
  $region1: #{tpu_custom_call.1} parent=0
    #allocation2 [shape = 'u8[4096]{0}', space=vmem, size = 0x1000, scoped, tag = 'input window, operand 0, single buffered']
    #allocation3 [shape = 's32[1]{0}', space=sflag, size = 0x4, scoped, tag = 'scoped memory for tpu_custom_call.1']
    #allocation4 [shape = 'u8[8192]{0}', space=vmem, size = 0x2000, scoped, tag = 'input window, operand 1, single buffered']
    #allocation5 [shape = 's32[1]{0}', space=sflag, size = 0x4, scoped, tag = 'scoped memory for tpu_custom_call.1']
    #allocation6 [shape = 'u8[40960]{0}', space=vmem, size = 0xa000, scoped, tag = 'input window, operand 5, single buffered']
    #allocation7 [shape = 'u8[40960]{0}', space=vmem, size = 0xa000, scoped, tag = 'input window, operand 7, single buffered']
    #allocation8 [shape = 's32[1]{0}', space=sflag, size = 0x4, scoped, tag = 'scoped memory for tpu_custom_call.1']
    %16 = vsyncpa [#allocation3], 0
    %17 = vsyncpa [#allocation5], 0
    %18 = vsyncpa [#allocation8], 0
    // Predicated region
    $region2: #{tpu_custom_call.1} parent=1 // pred_check
      _
    $region3: #{tpu_custom_call.1} parent=1 // pred_check_branch
      %20 = sbr.rel (0) target = $region5
    $region4: #{tpu_custom_call.1} parent=1 // pred_region
      %22 = vsyncadd [#allocation3], 0
      %s24 = sshll.u32 %s0, 4
      %s25 = int_to_ptr.hbm [resolvable:$true] %s24
      %s26 = sshll.u32 [#allocation2], 4
      %s27 = int_to_ptr.vmem [resolvable:$true] %s26
      %29 = dma.hbm_to_vmem [thread:$0]  %s25, 128, %s27, [#allocation3]
    $region5: #{tpu_custom_call.1} parent=1 // pred_fallthru
      _
    // Predicated region
    $region6: #{tpu_custom_call.1} parent=1 // pred_check
      _
    $region7: #{tpu_custom_call.1} parent=1 // pred_check_branch
      %31 = sbr.rel (0) target = $region9
    $region8: #{tpu_custom_call.1} parent=1 // pred_region
      %33 = vsyncadd [#allocation5], 0
      %s34 = sshll.u32 %s1, 4
      %s35 = int_to_ptr.hbm [resolvable:$true] %s34
      %s36 = sshll.u32 [#allocation4], 4
      %s37 = int_to_ptr.vmem [resolvable:$true] %s36
      %42 = dma.hbm_to_vmem [thread:$0]  %s35, 256, %s37, [#allocation5], 128, 128, 8
    $region9: #{tpu_custom_call.1} parent=1 // pred_fallthru
      _
    // Predicated region
    $region10: #{tpu_custom_call.1} parent=1 // pred_check
      _
    $region11: #{tpu_custom_call.1} parent=1 // pred_check_branch
      %44 = sbr.rel (0) target = $region13
    $region12: #{tpu_custom_call.1} parent=1 // pred_region
      _
    $region13: #{tpu_custom_call.1} parent=1 // pred_fallthru
      _
    // Predicated region
    $region14: #{tpu_custom_call.1} parent=1 // pred_check
      _
    $region15: #{tpu_custom_call.1} parent=1 // pred_check_branch
      %46 = sbr.rel (0) target = $region17
    $region16: #{tpu_custom_call.1} parent=1 // pred_region
      _
    $region17: #{tpu_custom_call.1} parent=1 // pred_fallthru
      _
    // Predicated region
    $region18: #{tpu_custom_call.1} parent=1 // pred_check
      _
    $region19: #{tpu_custom_call.1} parent=1 // pred_check_branch
      %48 = sbr.rel (0) target = $region21
    $region20: #{tpu_custom_call.1} parent=1 // pred_region
      _
    $region21: #{tpu_custom_call.1} parent=1 // pred_fallthru
      _
    // Predicated region
    $region22: #{tpu_custom_call.1} parent=1 // pred_check
      _
    $region23: #{tpu_custom_call.1} parent=1 // pred_check_branch
      %50 = sbr.rel (0) target = $region25
    $region24: #{tpu_custom_call.1} parent=1 // pred_region
      %52 = vsyncadd [#allocation5], 0
      %s53 = sshll.u32 %s5, 4
      %s54 = int_to_ptr.hbm [resolvable:$true] %s53
      %s55 = sshll.u32 [#allocation6], 4
      %s56 = int_to_ptr.vmem [resolvable:$true] %s55
      %61 = dma.hbm_to_vmem [thread:$0]  %s54, 1280, %s56, [#allocation5], 128, 128, 8
    $region25: #{tpu_custom_call.1} parent=1 // pred_fallthru
      _
    // Predicated region
    $region26: #{tpu_custom_call.1} parent=1 // pred_check
      _
    $region27: #{tpu_custom_call.1} parent=1 // pred_check_branch
      %63 = sbr.rel (0) target = $region29
    $region28: #{tpu_custom_call.1} parent=1 // pred_region
      _
    $region29: #{tpu_custom_call.1} parent=1 // pred_fallthru
      _
    // Predicated region
    $region30: #{tpu_custom_call.1} parent=1 // pred_check
      _
    $region31: #{tpu_custom_call.1} parent=1 // pred_check_branch
      %65 = sbr.rel (0) target = $region33
    $region32: #{tpu_custom_call.1} parent=1 // pred_region
      %67 = vsyncadd [#allocation8], 0
      %s68 = sshll.u32 %s7, 4
      %s69 = int_to_ptr.hbm [resolvable:$true] %s68
      %s70 = sshll.u32 [#allocation7], 4
      %s71 = int_to_ptr.vmem [resolvable:$true] %s70
      %76 = dma.hbm_to_vmem [thread:$0]  %s69, 1280, %s71, [#allocation8], 128, 128, 8
    $region33: #{tpu_custom_call.1} parent=1 // pred_fallthru
      _
    // Predicated region
    $region34: #{tpu_custom_call.1} parent=1 // pred_check
      _
    $region35: #{tpu_custom_call.1} parent=1 // pred_check_branch
      %78 = sbr.rel (0) target = $region37
    $region36: #{tpu_custom_call.1} parent=1 // pred_region
      _
    $region37: #{tpu_custom_call.1} parent=1 // pred_fallthru
      _
    // Predicated region
    $region38: #{tpu_custom_call.1} parent=1 // pred_check
      _
    $region39: #{tpu_custom_call.1} parent=1 // pred_check_branch
      %80 = sbr.rel (0) target = $region41
    $region40: #{tpu_custom_call.1} parent=1 // pred_region
      _
    $region41: #{tpu_custom_call.1} parent=1 // pred_fallthru
      _
    // Predicated region
    $region42: #{tpu_custom_call.1} parent=1 // pred_check
      _
    $region43: #{tpu_custom_call.1} parent=1 // pred_check_branch
      %82 = sbr.rel (0) target = $region45
    $region44: #{tpu_custom_call.1} parent=1 // pred_region
      _
    $region45: #{tpu_custom_call.1} parent=1 // pred_fallthru
      _
    // Predicated region
    $region46: #{tpu_custom_call.1} parent=1 // pred_check
      _
    $region47: #{tpu_custom_call.1} parent=1 // pred_check_branch
      %84 = sbr.rel (0) target = $region49
    $region48: #{tpu_custom_call.1} parent=1 // pred_region
      %86 = dma.done [#allocation3], 128
    $region49: #{tpu_custom_call.1} parent=1 // pred_fallthru
      _
    // Predicated region
    $region50: #{tpu_custom_call.1} parent=1 // pred_check
      _
    $region51: #{tpu_custom_call.1} parent=1 // pred_check_branch
      %88 = sbr.rel (0) target = $region53
    $region52: #{tpu_custom_call.1} parent=1 // pred_region
      %90 = dma.done [#allocation5], 256
    $region53: #{tpu_custom_call.1} parent=1 // pred_fallthru
      _
    // Predicated region
    $region54: #{tpu_custom_call.1} parent=1 // pred_check
      _
    $region55: #{tpu_custom_call.1} parent=1 // pred_check_branch
      %92 = sbr.rel (0) target = $region57
    $region56: #{tpu_custom_call.1} parent=1 // pred_region
      %94 = dma.done [#allocation5], 1280
    $region57: #{tpu_custom_call.1} parent=1 // pred_fallthru
      _
    // Predicated region
    $region58: #{tpu_custom_call.1} parent=1 // pred_check
      _
    $region59: #{tpu_custom_call.1} parent=1 // pred_check_branch
      %96 = sbr.rel (0) target = $region61
    $region60: #{tpu_custom_call.1} parent=1 // pred_region
      %98 = dma.done [#allocation8], 1280
    $region61: #{tpu_custom_call.1} parent=1 // pred_fallthru
      _
    %v100 = vld [vmem:[#allocation2] sm:$0xff]
    %v101 = vpack.c.bf16 %v100, %v100
    %v102 = vld [vmem:[#allocation4] sm:$0xff]
    %v103 = vld [vmem:[#allocation4 + $0x8] sm:$0xff]
    %v104 = vpack.c.bf16 %v103, %v102
    %v105 = vld [vmem:[%s2] sm:$0x1]
    %v107 = vperm.slane %v105, 0
    %vm109 = vcmask 130048
    %v111 = vsel %vm109, %v101, 0
    %113 = vmatpush.bf16.msra.mxu0 0
    %114 = vmatpush.bf16.msra.mxu0 0
    %115 = vmatpush.bf16.msra.mxu0 0
    %116 = vmatpush.bf16.msra.mxu0 0
    %117 = vmatpush.bf16.msra.mxu0 0
    %118 = vmatpush.bf16.msra.mxu0 0
    %119 = vmatpush.bf16.msra.mxu0 0
    %120 = vmatpush.bf16.msra.mxu0 %v104
    %121 = vmatmul.bf16.gmra.mxu0 %v111
    %v122 = vpop.f32.mrf.mxu0
    %v123 = vadd.f32 %v107, %v122
    %v124 = vpop.f32.mrf.mxu0
    %125 = vdwg.mxu0
    %v126 = vtanh.pop %v123
    %v127 = vpack.c.bf16 %v126, %v126
    %v128 = vld [vmem:[%s3] sm:$0xff]
    %v129 = vld [vmem:[%s3 + $0x8] sm:$0xff]
    %v130 = vld [vmem:[%s3 + $0x10] sm:$0xff]
    %v131 = vld [vmem:[%s3 + $0x18] sm:$0xff]
    %v132 = vld [vmem:[%s3 + $0x20] sm:$0xff]
    %v133 = vld [vmem:[%s3 + $0x28] sm:$0xff]
    %v134 = vld [vmem:[%s3 + $0x30] sm:$0xff]
    %v135 = vld [vmem:[%s3 + $0x38] sm:$0xff]
    %v136 = vld [vmem:[%s3 + $0x40] sm:$0xff]
    %v137 = vld [vmem:[%s3 + $0x48] sm:$0xff]
    %v138 = vpack.c.bf16 %v129, %v128
    %v139 = vpack.c.bf16 %v131, %v130
    %v140 = vpack.c.bf16 %v133, %v132
    %v141 = vpack.c.bf16 %v135, %v134
    %v142 = vpack.c.bf16 %v137, %v136
    %v143 = vld [vmem:[%s4] sm:$0x1]
    %v145 = vperm.slane %v143, 0
    %vm147 = vcmask 654336
    %v149 = vsel %vm147, %v127, 0
    %151 = vmatpush.bf16.msra.mxu0 0
    %152 = vmatpush.bf16.msra.mxu0 0
    %153 = vmatpush.bf16.msra.mxu0 0
    %154 = vmatpush.bf16.msra.mxu0 %v142
    %155 = vmatpush.bf16.msra.mxu0 %v141
    %156 = vmatpush.bf16.msra.mxu0 %v140
    %157 = vmatpush.bf16.msra.mxu0 %v139
    %158 = vmatpush.bf16.msra.mxu0 %v138
    %159 = vmatmul.bf16.gmra.mxu0 %v149
    %v160 = vpop.f32.mrf.mxu0
    %v161 = vadd.f32 %v145, %v160
    %v162 = vpop.f32.mrf.mxu0
    %163 = vdwg.mxu0
    %v164 = vtanh.pop %v161
    %v165 = vpack.c.bf16 %v164, %v164
    %v166 = vld [vmem:[#allocation6] sm:$0xff]
    %v167 = vld [vmem:[#allocation6 + $0x8] sm:$0xff]
    %v168 = vld [vmem:[#allocation6 + $0x10] sm:$0xff]
    %v169 = vld [vmem:[#allocation6 + $0x18] sm:$0xff]
    %v170 = vld [vmem:[#allocation6 + $0x20] sm:$0xff]
    %v171 = vld [vmem:[#allocation6 + $0x28] sm:$0xff]
    %v172 = vld [vmem:[#allocation6 + $0x30] sm:$0xff]
    %v173 = vld [vmem:[#allocation6 + $0x38] sm:$0xff]
    %v174 = vld [vmem:[#allocation6 + $0x40] sm:$0xff]
    %v175 = vld [vmem:[#allocation6 + $0x48] sm:$0xff]
    %v176 = vpack.c.bf16 %v167, %v166
    %v177 = vpack.c.bf16 %v169, %v168
    %v178 = vpack.c.bf16 %v171, %v170
    %v179 = vpack.c.bf16 %v173, %v172
    %v180 = vpack.c.bf16 %v175, %v174
    %v181 = vld [vmem:[%s6] sm:$0x1]
    %v183 = vperm.slane %v181, 0
    %v186 = vsel %vm147, %v165, 0
    %188 = vmatpush.bf16.msra.mxu0 0
    %189 = vmatpush.bf16.msra.mxu0 0
    %190 = vmatpush.bf16.msra.mxu0 0
    %191 = vmatpush.bf16.msra.mxu0 %v180
    %192 = vmatpush.bf16.msra.mxu0 %v179
    %193 = vmatpush.bf16.msra.mxu0 %v178
    %194 = vmatpush.bf16.msra.mxu0 %v177
    %195 = vmatpush.bf16.msra.mxu0 %v176
    %196 = vmatmul.bf16.gmra.mxu0 %v186
    %v197 = vpop.f32.mrf.mxu0
    %v198 = vadd.f32 %v183, %v197
    %v199 = vpop.f32.mrf.mxu0
    %200 = vdwg.mxu0
    %v201 = vtanh.pop %v198
    %v202 = vpack.c.bf16 %v201, %v201
    %v203 = vld [vmem:[#allocation7] sm:$0xff]
    %v204 = vld [vmem:[#allocation7 + $0x8] sm:$0xff]
    %v205 = vld [vmem:[#allocation7 + $0x10] sm:$0xff]
    %v206 = vld [vmem:[#allocation7 + $0x18] sm:$0xff]
    %v207 = vld [vmem:[#allocation7 + $0x20] sm:$0xff]
    %v208 = vld [vmem:[#allocation7 + $0x28] sm:$0xff]
    %v209 = vld [vmem:[#allocation7 + $0x30] sm:$0xff]
    %v210 = vld [vmem:[#allocation7 + $0x38] sm:$0xff]
    %v211 = vld [vmem:[#allocation7 + $0x40] sm:$0xff]
    %v212 = vld [vmem:[#allocation7 + $0x48] sm:$0xff]
    %v213 = vpack.c.bf16 %v204, %v203
    %v214 = vpack.c.bf16 %v206, %v205
    %v215 = vpack.c.bf16 %v208, %v207
    %v216 = vpack.c.bf16 %v210, %v209
    %v217 = vpack.c.bf16 %v212, %v211
    %v218 = vld [vmem:[%s8] sm:$0x1]
    %v220 = vperm.slane %v218, 0
    %v223 = vsel %vm147, %v202, 0
    %225 = vmatpush.bf16.msra.mxu0 0
    %226 = vmatpush.bf16.msra.mxu0 0
    %227 = vmatpush.bf16.msra.mxu0 0
    %228 = vmatpush.bf16.msra.mxu0 %v217
    %229 = vmatpush.bf16.msra.mxu0 %v216
    %230 = vmatpush.bf16.msra.mxu0 %v215
    %231 = vmatpush.bf16.msra.mxu0 %v214
    %232 = vmatpush.bf16.msra.mxu0 %v213
    %233 = vmatmul.bf16.gmra.mxu0 %v223
    %v234 = vpop.f32.mrf.mxu0
    %v235 = vadd.f32 %v220, %v234
    %v236 = vpop.f32.mrf.mxu0
    %237 = vdwg.mxu0
    %v238 = vtanh.pop %v235
    %v239 = vpack.c.bf16 %v238, %v238
    %v240 = vld [vmem:[%s9] sm:$0xff]
    %v241 = vld [vmem:[%s9 + $0x8] sm:$0xff]
    %v242 = vld [vmem:[%s9 + $0x10] sm:$0xff]
    %v243 = vld [vmem:[%s9 + $0x18] sm:$0xff]
    %v244 = vld [vmem:[%s9 + $0x20] sm:$0xff]
    %v245 = vld [vmem:[%s9 + $0x28] sm:$0xff]
    %v246 = vld [vmem:[%s9 + $0x30] sm:$0xff]
    %v247 = vld [vmem:[%s9 + $0x38] sm:$0xff]
    %v248 = vld [vmem:[%s9 + $0x40] sm:$0xff]
    %v249 = vld [vmem:[%s9 + $0x48] sm:$0xff]
    %v250 = vpack.c.bf16 %v241, %v240
    %v251 = vpack.c.bf16 %v243, %v242
    %v252 = vpack.c.bf16 %v245, %v244
    %v253 = vpack.c.bf16 %v247, %v246
    %v254 = vpack.c.bf16 %v249, %v248
    %v255 = vld [vmem:[%s10] sm:$0x1]
    %v257 = vperm.slane %v255, 0
    %v260 = vsel %vm147, %v239, 0
    %262 = vmatpush.bf16.msra.mxu0 0
    %263 = vmatpush.bf16.msra.mxu0 0
    %264 = vmatpush.bf16.msra.mxu0 0
    %265 = vmatpush.bf16.msra.mxu0 %v254
    %266 = vmatpush.bf16.msra.mxu0 %v253
    %267 = vmatpush.bf16.msra.mxu0 %v252
    %268 = vmatpush.bf16.msra.mxu0 %v251
    %269 = vmatpush.bf16.msra.mxu0 %v250
    %270 = vmatmul.bf16.gmra.mxu0 %v260
    %v271 = vpop.f32.mrf.mxu0
    %v272 = vadd.f32 %v257, %v271
    %v273 = vpop.f32.mrf.mxu0
    %274 = vdwg.mxu0
    %v275 = vtanh.pop %v272
    %vm276 = vcmask 31744
    %277 = vst.msk [vmem:[%s11] sm:$0xff] %vm276, %v275
    // Predicated region
    $region62: #{tpu_custom_call.1} parent=1 // pred_check
      _
    $region63: #{tpu_custom_call.1} parent=1 // pred_check_branch
      %279 = sbr.rel (0) target = $region65
    $region64: #{tpu_custom_call.1} parent=1 // pred_region
      _
    $region65: #{tpu_custom_call.1} parent=1 // pred_fallthru
      _
    // Predicated region
    $region66: #{tpu_custom_call.1} parent=1 // pred_check
      _
    $region67: #{tpu_custom_call.1} parent=1 // pred_check_branch
      %281 = sbr.rel (0) target = $region69
    $region68: #{tpu_custom_call.1} parent=1 // pred_region
      _
    $region69: #{tpu_custom_call.1} parent=1 // pred_fallthru
      _
    %282 = vsyncpa [#allocation3], 1
    %283 = vsyncpa [#allocation5], 1
    %284 = vsyncpa [#allocation8], 1

</llo_original>
